<compile_context>
chip_gen: v7x
topology: tpu7x:2x2x1
jax: 0.10.0
libtpu: 0.0.40
codegen_flags: <defaults>
</compile_context>

<pallas_src>
import jax
import jax.numpy as jnp
from jax.experimental import pallas as pl
from jax.experimental.pallas import tpu as pltpu


def _round_up(x, m):
    return ((x + m - 1) // m) * m


def _mlp_policy_kernel(stream_ref, const_ref,
                       ws_ref, wc_ref, b1_ref,
                       w2_ref, b2_ref, w3_ref, b3_ref,
                       o_ref):
    # Time-invariant part of layer 1 for this batch element: one tiny matmul
    # per grid step (not per row).  f32 accumulation throughout.
    base = (jnp.dot(const_ref[...], wc_ref[...],
                    preferred_element_type=jnp.float32)
            + b1_ref[...])                                              # (1, H) f32

    h1 = jnp.dot(stream_ref[...], ws_ref[...],
                 preferred_element_type=jnp.float32) + base             # (tt, H)
    h1 = jnp.maximum(h1, 0.0)                                           # ReLU in f32
    h2 = jnp.dot(h1.astype(jnp.bfloat16), w2_ref[...],
                 preferred_element_type=jnp.float32) + b2_ref[...]
    h2 = jnp.maximum(h2, 0.0)
    out = jnp.dot(h2.astype(jnp.bfloat16), w3_ref[...],
                  preferred_element_type=jnp.float32) + b3_ref[...]
    o_ref[...] = out.astype(o_ref.dtype)


def simple_mlp_policy_forward(latent_plan, perceptual_emb, latent_goal, params,
                              *, tt_max=512):
    """Reproduces SimpleMLPPolicyNetwork.forward with a fused Pallas kernel."""
    B, T, Dper = perceptual_emb.shape

    # --- normalize latent_goal to one vector per batch element: (B, 1, Dg) ---
    goal = latent_goal[:, None, :] if latent_goal.ndim == 2 else latent_goal[:, :1, :]
    Dg = goal.shape[-1]

    # --- latent_plan: per-batch constant or time-varying ---------------------
    plan_is_const = True
    if latent_plan.ndim == 2:
        plan = latent_plan[:, None, :]                       # (B, 1, Dp)
    elif latent_plan.shape[1] == 1:
        plan = latent_plan                                    # (B, 1, Dp)
    else:
        # Module passes a (B, T, Dp) plan through unbroadcast.
        assert latent_plan.shape[1] == T, "time-varying plan must match seq_len"
        plan = latent_plan                                    # (B, T, Dp)
        plan_is_const = False
    Dp = plan.shape[-1]

    w1 = params["w1"]
    H = w1.shape[1]
    O = params["w3"].shape[1]
    assert w1.shape[0] == Dp + Dper + Dg

    cast = lambda a: a.astype(jnp.bfloat16)

    # Split W1 by the concat order torch.cat([plan, perc, goal], dim=-1) into
    # a "streamed" (time-varying) part and a per-batch "constant" part.
    if plan_is_const:
        stream = perceptual_emb                                          # (B, T, Dper)
        w_stream = w1[Dp:Dp + Dper]                                      # (Dper, H)
        const_feat = jnp.concatenate([plan, goal], axis=-1)              # (B, 1, Dp+Dg)
        w_const = jnp.concatenate([w1[:Dp], w1[Dp + Dper:]], axis=0)     # (Dp+Dg, H)
    else:
        stream = jnp.concatenate([plan, perceptual_emb], axis=-1)        # (B, T, Dp+Dper)
        w_stream = w1[:Dp + Dper]                                        # (Dp+Dper, H)
        const_feat = goal                                                # (B, 1, Dg)
        w_const = w1[Dp + Dper:]                                         # (Dg, H)
    Ds = stream.shape[-1]
    Dc = const_feat.shape[-1]

    stream_b, const_b = cast(stream), cast(const_feat)
    ws_b, wc_b = cast(w_stream), cast(w_const)
    w2_b, w3_b = cast(params["w2"]), cast(params["w3"])
    b1 = params["b1"].reshape(1, H).astype(jnp.float32)
    b2 = params["b2"].reshape(1, H).astype(jnp.float32)
    b3 = params["b3"].reshape(1, O).astype(jnp.float32)

    # Big time tiles; pad T up to a tile multiple (no divisibility assert).
    tt = min(tt_max, _round_up(T, 8))
    T_pad = _round_up(T, tt)
    if T_pad != T:
        stream_b = jnp.pad(stream_b, ((0, 0), (0, T_pad - T), (0, 0)))

    grid = (B, T_pad // tt)
    const2d = lambda d0, d1: pl.BlockSpec((d0, d1), lambda b, t: (0, 0))

    out = pl.pallas_call(
        _mlp_policy_kernel,
        out_shape=jax.ShapeDtypeStruct((B, T_pad, O), jnp.float32),
        grid_spec=pltpu.PrefetchScalarGridSpec(
            num_scalar_prefetch=0,
            grid=grid,
            in_specs=[
                pl.BlockSpec((None, tt, Ds), lambda b, t: (b, t, 0)),  # streamed features
                pl.BlockSpec((None, 1, Dc), lambda b, t: (b, 0, 0)),   # per-batch constants
                const2d(Ds, H),   # W1 rows for streamed features (VMEM-resident)
                const2d(Dc, H),   # W1 rows for constant features
                const2d(1, H),    # b1
                const2d(H, H),    # w2
                const2d(1, H),    # b2
                const2d(H, O),    # w3
                const2d(1, O),    # b3
            ],
            out_specs=pl.BlockSpec((None, tt, O), lambda b, t: (b, t, 0)),
        ),
        compiler_params=pltpu.CompilerParams(
            dimension_semantics=("parallel", "parallel")),
    )(stream_b, const_b, ws_b, wc_b, b1, w2_b, b2, w3_b, b3)

    return out[:, :T, :]


def init_params(key, in_features, hidden_size, out_features):
    k1, k2, k3, k4, k5, k6 = jax.random.split(key, 6)
    scale1 = 1.0 / jnp.sqrt(in_features)
    scale2 = 1.0 / jnp.sqrt(hidden_size)
    return {
        "w1": jax.random.uniform(k1, (in_features, hidden_size), jnp.float32,
                                 -scale1, scale1),
        "b1": jax.random.uniform(k2, (1, hidden_size), jnp.float32, -scale1, scale1),
        "w2": jax.random.uniform(k3, (hidden_size, hidden_size), jnp.float32,
                                 -scale2, scale2),
        "b2": jax.random.uniform(k4, (1, hidden_size), jnp.float32, -scale2, scale2),
        "w3": jax.random.uniform(k5, (hidden_size, out_features), jnp.float32,
                                 -scale2, scale2),
        "b3": jax.random.uniform(k6, (1, out_features), jnp.float32, -scale2, scale2),
    }


if __name__ == "__main__":
    # Small shapes consistent with the module's forward.
    B, T = 2, 8
    perceptual_features = 32
    latent_goal_features = 16
    plan_features = 16
    hidden_size = 32
    out_features = 8
    in_features = perceptual_features + latent_goal_features + plan_features  # 64

    key = jax.random.PRNGKey(0)
    kp, kperc, kg, kparams = jax.random.split(key, 4)

    latent_plan = jax.random.normal(kp, (B, plan_features), jnp.float32)             # (B, Dp)
    perceptual_emb = jax.random.normal(kperc, (B, T, perceptual_features), jnp.float32)
    latent_goal = jax.random.normal(kg, (B, 1, latent_goal_features), jnp.float32)    # (B, 1, Dg)

    params = init_params(kparams, in_features, hidden_size, out_features)

    pred_actions = simple_mlp_policy_forward(latent_plan, perceptual_emb,
                                             latent_goal, params)
    pred_actions = jax.block_until_ready(pred_actions)

    # Pure-JAX f32 reference (the kernel uses bf16 dot inputs with f32 accumulation,
    # so compare within bf16 tolerance).
    plan_r = jnp.broadcast_to(latent_plan[:, None, :], (B, T, plan_features))
    goal_r = jnp.broadcast_to(latent_goal, (B, T, latent_goal_features))
    x_ref = jnp.concatenate([plan_r, perceptual_emb, goal_r], axis=-1).reshape(
        B * T, in_features)
    h1 = jnp.maximum(x_ref @ params["w1"] + params["b1"], 0.0)
    h2 = jnp.maximum(h1 @ params["w2"] + params["b2"], 0.0)
    ref = (h2 @ params["w3"] + params["b3"]).reshape(B, T, out_features)

    assert pred_actions.shape == (B, T, out_features)
    max_err = float(jnp.max(jnp.abs(pred_actions - ref)))
    assert jnp.allclose(pred_actions, ref, atol=3e-2, rtol=3e-2), max_err
    print("KERNEL_OK")
</pallas_src>

<mosaic_0001>
module attributes {stable_mosaic.version = 11 : i64} {
  func.func @_mlp_policy_kernel(%arg0: i32, %arg1: i32, %arg2: memref<1x8x32xbf16, #tpu.memory_space<vmem>>, %arg3: memref<1x1x32xbf16, #tpu.memory_space<vmem>>, %arg4: memref<32x32xbf16, #tpu.memory_space<vmem>>, %arg5: memref<32x32xbf16, #tpu.memory_space<vmem>>, %arg6: memref<1x32xf32, #tpu.memory_space<vmem>>, %arg7: memref<32x32xbf16, #tpu.memory_space<vmem>>, %arg8: memref<1x32xf32, #tpu.memory_space<vmem>>, %arg9: memref<32x8xbf16, #tpu.memory_space<vmem>>, %arg10: memref<1x8xf32, #tpu.memory_space<vmem>>, %arg11: memref<1x8x8xf32, #tpu.memory_space<vmem>>) attributes {dimension_semantics = [#tpu.dimension_semantics<parallel>, #tpu.dimension_semantics<parallel>], iteration_bounds = array<i64: 2, 1>, scalar_prefetch = 0 : i64, scratch_operands = 0 : i64, tpu.core_type = #tpu.core_type<tc>, window_params = [{transform_indices = @transform_0, window_bounds = array<i64: 1, 8, 32>}, {transform_indices = @transform_1, window_bounds = array<i64: 1, 1, 32>}, {pipeline_mode = #tpu.pipeline_mode<synchronous>, transform_indices = @transform_2, window_bounds = array<i64: 32, 32>}, {pipeline_mode = #tpu.pipeline_mode<synchronous>, transform_indices = @transform_3, window_bounds = array<i64: 32, 32>}, {pipeline_mode = #tpu.pipeline_mode<synchronous>, transform_indices = @transform_4, window_bounds = array<i64: 1, 32>}, {pipeline_mode = #tpu.pipeline_mode<synchronous>, transform_indices = @transform_5, window_bounds = array<i64: 32, 32>}, {pipeline_mode = #tpu.pipeline_mode<synchronous>, transform_indices = @transform_6, window_bounds = array<i64: 1, 32>}, {pipeline_mode = #tpu.pipeline_mode<synchronous>, transform_indices = @transform_7, window_bounds = array<i64: 32, 8>}, {pipeline_mode = #tpu.pipeline_mode<synchronous>, transform_indices = @transform_8, window_bounds = array<i64: 1, 8>}, {transform_indices = @transform_9, window_bounds = array<i64: 1, 8, 8>}]} {
    %c0 = arith.constant 0 : index
    %c0_0 = arith.constant 0 : index
    %c0_1 = arith.constant 0 : index
    %0 = vector.load %arg3[%c0, %c0_0, %c0_1] : memref<1x1x32xbf16, #tpu.memory_space<vmem>>, vector<1x1x32xbf16>
    %1 = vector.shape_cast %0 : vector<1x1x32xbf16> to vector<1x32xbf16>
    %c0_2 = arith.constant 0 : index
    %c0_3 = arith.constant 0 : index
    %2 = vector.load %arg5[%c0_2, %c0_3] : memref<32x32xbf16, #tpu.memory_space<vmem>>, vector<32x32xbf16>
    %cst = arith.constant dense<0.000000e+00> : vector<1x32xf32>
    %3 = tpu.matmul %1, %2, %cst {dimension_numbers = #tpu.dot_dimension_numbers<[1], [0], [0], [1], [0, 0, 1, 1], [], []>} : vector<1x32xbf16>, vector<32x32xbf16>, vector<1x32xf32> -> vector<1x32xf32>
    %c0_4 = arith.constant 0 : index
    %c0_5 = arith.constant 0 : index
    %4 = vector.load %arg6[%c0_4, %c0_5] : memref<1x32xf32, #tpu.memory_space<vmem>>, vector<1x32xf32>
    %5 = arith.addf %3, %4 : vector<1x32xf32>
    %c0_6 = arith.constant 0 : index
    %c0_7 = arith.constant 0 : index
    %c0_8 = arith.constant 0 : index
    %6 = vector.load %arg2[%c0_6, %c0_7, %c0_8] : memref<1x8x32xbf16, #tpu.memory_space<vmem>>, vector<1x8x32xbf16>
    %7 = vector.shape_cast %6 : vector<1x8x32xbf16> to vector<8x32xbf16>
    %c0_9 = arith.constant 0 : index
    %c0_10 = arith.constant 0 : index
    %8 = vector.load %arg4[%c0_9, %c0_10] : memref<32x32xbf16, #tpu.memory_space<vmem>>, vector<32x32xbf16>
    %cst_11 = arith.constant dense<0.000000e+00> : vector<8x32xf32>
    %9 = tpu.matmul %7, %8, %cst_11 {dimension_numbers = #tpu.dot_dimension_numbers<[1], [0], [0], [1], [0, 0, 1, 1], [], []>} : vector<8x32xbf16>, vector<32x32xbf16>, vector<8x32xf32> -> vector<8x32xf32>
    %10 = vector.broadcast %5 : vector<1x32xf32> to vector<8x32xf32>
    %11 = arith.addf %9, %10 : vector<8x32xf32>
    %cst_12 = arith.constant 0.000000e+00 : f32
    %12 = vector.broadcast %cst_12 : f32 to vector<8x32xf32>
    %13 = arith.maximumf %11, %12 : vector<8x32xf32>
    %14 = arith.truncf %13 : vector<8x32xf32> to vector<8x32xbf16>
    %c0_13 = arith.constant 0 : index
    %c0_14 = arith.constant 0 : index
    %15 = vector.load %arg7[%c0_13, %c0_14] : memref<32x32xbf16, #tpu.memory_space<vmem>>, vector<32x32xbf16>
    %cst_15 = arith.constant dense<0.000000e+00> : vector<8x32xf32>
    %16 = tpu.matmul %14, %15, %cst_15 {dimension_numbers = #tpu.dot_dimension_numbers<[1], [0], [0], [1], [0, 0, 1, 1], [], []>} : vector<8x32xbf16>, vector<32x32xbf16>, vector<8x32xf32> -> vector<8x32xf32>
    %c0_16 = arith.constant 0 : index
    %c0_17 = arith.constant 0 : index
    %17 = vector.load %arg8[%c0_16, %c0_17] : memref<1x32xf32, #tpu.memory_space<vmem>>, vector<1x32xf32>
    %18 = vector.broadcast %17 : vector<1x32xf32> to vector<8x32xf32>
    %19 = arith.addf %16, %18 : vector<8x32xf32>
    %cst_18 = arith.constant 0.000000e+00 : f32
    %20 = vector.broadcast %cst_18 : f32 to vector<8x32xf32>
    %21 = arith.maximumf %19, %20 : vector<8x32xf32>
    %22 = arith.truncf %21 : vector<8x32xf32> to vector<8x32xbf16>
    %c0_19 = arith.constant 0 : index
    %c0_20 = arith.constant 0 : index
    %23 = vector.load %arg9[%c0_19, %c0_20] : memref<32x8xbf16, #tpu.memory_space<vmem>>, vector<32x8xbf16>
    %cst_21 = arith.constant dense<0.000000e+00> : vector<8x8xf32>
    %24 = tpu.matmul %22, %23, %cst_21 {dimension_numbers = #tpu.dot_dimension_numbers<[1], [0], [0], [1], [0, 0, 1, 1], [], []>} : vector<8x32xbf16>, vector<32x8xbf16>, vector<8x8xf32> -> vector<8x8xf32>
    %c0_22 = arith.constant 0 : index
    %c0_23 = arith.constant 0 : index
    %25 = vector.load %arg10[%c0_22, %c0_23] : memref<1x8xf32, #tpu.memory_space<vmem>>, vector<1x8xf32>
    %26 = vector.broadcast %25 : vector<1x8xf32> to vector<8x8xf32>
    %27 = arith.addf %24, %26 : vector<8x8xf32>
    %c0_24 = arith.constant 0 : index
    %c0_25 = arith.constant 0 : index
    %c0_26 = arith.constant 0 : index
    %28 = vector.load %arg11[%c0_24, %c0_25, %c0_26] : memref<1x8x8xf32, #tpu.memory_space<vmem>>, vector<1x8x8xf32>
    %29 = vector.shape_cast %28 : vector<1x8x8xf32> to vector<8x8xf32>
    %30 = vector.shape_cast %27 : vector<8x8xf32> to vector<1x8x8xf32>
    tpu.vector_store %arg11[%c0_24, %c0_25, %c0_26], %30 {strides = array<i32>} : memref<1x8x8xf32, #tpu.memory_space<vmem>>, vector<1x8x8xf32>,
    return
  }
  func.func @transform_0(%arg0: i32, %arg1: i32) -> (i32, i32, i32) {
    %c0_i32 = arith.constant 0 : i32
    %c0_i32_0 = arith.constant 0 : i32
    return %arg0, %arg1, %c0_i32 : i32, i32, i32
  }
  func.func @transform_1(%arg0: i32, %arg1: i32) -> (i32, i32, i32) {
    %c0_i32 = arith.constant 0 : i32
    %c0_i32_0 = arith.constant 0 : i32
    %c0_i32_1 = arith.constant 0 : i32
    return %arg0, %c0_i32, %c0_i32_0 : i32, i32, i32
  }
  func.func @transform_2(%arg0: i32, %arg1: i32) -> (i32, i32) {
    %c0_i32 = arith.constant 0 : i32
    %c0_i32_0 = arith.constant 0 : i32
    %c0_i32_1 = arith.constant 0 : i32
    return %c0_i32, %c0_i32_0 : i32, i32
  }
  func.func @transform_3(%arg0: i32, %arg1: i32) -> (i32, i32) {
    %c0_i32 = arith.constant 0 : i32
    %c0_i32_0 = arith.constant 0 : i32
    %c0_i32_1 = arith.constant 0 : i32
    return %c0_i32, %c0_i32_0 : i32, i32
  }
  func.func @transform_4(%arg0: i32, %arg1: i32) -> (i32, i32) {
    %c0_i32 = arith.constant 0 : i32
    %c0_i32_0 = arith.constant 0 : i32
    %c0_i32_1 = arith.constant 0 : i32
    return %c0_i32, %c0_i32_0 : i32, i32
  }
  func.func @transform_5(%arg0: i32, %arg1: i32) -> (i32, i32) {
    %c0_i32 = arith.constant 0 : i32
    %c0_i32_0 = arith.constant 0 : i32
    %c0_i32_1 = arith.constant 0 : i32
    return %c0_i32, %c0_i32_0 : i32, i32
  }
  func.func @transform_6(%arg0: i32, %arg1: i32) -> (i32, i32) {
    %c0_i32 = arith.constant 0 : i32
    %c0_i32_0 = arith.constant 0 : i32
    %c0_i32_1 = arith.constant 0 : i32
    return %c0_i32, %c0_i32_0 : i32, i32
  }
  func.func @transform_7(%arg0: i32, %arg1: i32) -> (i32, i32) {
    %c0_i32 = arith.constant 0 : i32
    %c0_i32_0 = arith.constant 0 : i32
    %c0_i32_1 = arith.constant 0 : i32
    return %c0_i32, %c0_i32_0 : i32, i32
  }
  func.func @transform_8(%arg0: i32, %arg1: i32) -> (i32, i32) {
    %c0_i32 = arith.constant 0 : i32
    %c0_i32_0 = arith.constant 0 : i32
    %c0_i32_1 = arith.constant 0 : i32
    return %c0_i32, %c0_i32_0 : i32, i32
  }
  func.func @transform_9(%arg0: i32, %arg1: i32) -> (i32, i32, i32) {
    %c0_i32 = arith.constant 0 : i32
    %c0_i32_0 = arith.constant 0 : i32
    return %arg0, %arg1, %c0_i32 : i32, i32, i32
  }
}

</mosaic_0001>

<llo_original>
// kernel: tpu_custom_call.1
$region0: #{tpu_custom_call.1}
  #allocation0 [shape = 'u32[]', space=smem, size = 0x4, offset = 0x4, fixed_abs, tag = 'smem constant byte address 0x4 - core index']
  #allocation1 [shape = 'u32[144,128]{1,0:T(1,128)}', space=vmem, size = 0x12000, scoped, tag = 'internal scratch']
  %s0 = inlined_call_operand.hbm [shape: bf16[2,8,32], index: 0, kind: input, shape index: {}]
  %s1 = inlined_call_operand.vmem [shape: bf16[2,1,32], index: 1, kind: input, shape index: {}]
  %s2 = inlined_call_operand.vmem [shape: bf16[32,32], index: 2, kind: input, shape index: {}]
  %s3 = inlined_call_operand.vmem [shape: bf16[32,32], index: 3, kind: input, shape index: {}]
  %s4 = inlined_call_operand.vmem [shape: f32[1,32], index: 4, kind: input, shape index: {}]
  %s5 = inlined_call_operand.hbm [shape: bf16[32,32], index: 5, kind: input, shape index: {}]
  %s6 = inlined_call_operand.vmem [shape: f32[1,32], index: 6, kind: input, shape index: {}]
  %s7 = inlined_call_operand.vmem [shape: bf16[32,8], index: 7, kind: input, shape index: {}]
  %s8 = inlined_call_operand.vmem [shape: f32[1,8], index: 8, kind: input, shape index: {}]
  %s9 = inlined_call_operand.hbm [shape: f32[2,8,8], index: 9, kind: output, shape index: {}]
  %s10 = sld [smem:[#allocation0]]
  $region77: #{tpu_custom_call.1} parent=0
    _
  %s12 = ssub.s32 1, %s10
  %s13 = scalar_select 0, %s12, %s10
  $region1: #{tpu_custom_call.1} parent=0
    #allocation2 [shape = 'u8[4096]{0}', space=vmem, size = 0x1000, scoped, tag = 'input window, operand 0']
    #allocation3 [shape = 's32[2]{0}', space=sflag, size = 0x8, scoped, tag = 'scoped memory for tpu_custom_call.1']
    #allocation4 [shape = 's32[2]{0}', space=sflag, size = 0x8, scoped, tag = 'scoped memory for tpu_custom_call.1']
    #allocation5 [shape = 'u8[8192]{0}', space=vmem, size = 0x2000, scoped, tag = 'input window, operand 5, single buffered']
    #allocation6 [shape = 's32[1]{0}', space=sflag, size = 0x4, scoped, tag = 'scoped memory for tpu_custom_call.1']
    #allocation7 [shape = 'u8[8192]{0}', space=vmem, size = 0x2000, scoped, tag = 'output window, operand 0']
    %14 = vsyncpa [#allocation3], 0
    %s15 = scalar_lea.sflag [#allocation3], 1
    %16 = vsyncpa %s15, 0
    %17 = vsyncpa [#allocation6], 0
    %18 = vsyncpa [#allocation4], 0
    %s19 = scalar_lea.sflag [#allocation4], 1
    %20 = vsyncpa %s19, 0
    loop: start=0, step=1, limit=4
    $region2: #{tpu_custom_call.1} parent=1 // loop_pre_header
      _
    $region3: #{tpu_custom_call.1} parent=1 // loop_header
      %s22 = sphi 0, %s26
      %p23 = scmp.ge.s32.totalorder %s22, 4
      %s29 = sphi 0, %s41
      %s30 = sphi 0, %s37
      %s31 = sphi 0, %s29
      %s32 = sphi 0, %s30
      %s33 = sphi 0, %s31
      %s34 = sphi 0, %s32
      %s46 = sphi 0, %s48
      %s49 = sphi 0, %s46
      %s50 = sphi 0, %s49
      %s66 = sphi 0, %s50
      %s72 = sphi 0, %s74
      %s75 = sphi 0, %s72
      %s76 = sphi 0, %s75
      %s92 = sphi 0, %s76
      %s96 = sphi 0, %s96
      %s98 = sphi 0, %s96
      %s99 = sphi 0, %s98
      %s113 = sphi 0, %s99
      %s117 = sphi 0, %s117
      %s119 = sphi 0, %s117
      %s120 = sphi 0, %s119
      %s134 = sphi 0, %s120
      %s138 = sphi 0, %s138
      %s140 = sphi 0, %s138
      %s141 = sphi 0, %s140
      %s155 = sphi 0, %s141
      %s159 = sphi 0, %s159
      %s161 = sphi 0, %s159
      %s162 = sphi 0, %s161
      %s176 = sphi 0, %s162
      %s180 = sphi 0, %s180
      %s182 = sphi 0, %s180
      %s183 = sphi 0, %s182
      %s197 = sphi 0, %s183
      %s201 = sphi 0, %s201
      %s203 = sphi 0, %s201
      %s204 = sphi 0, %s203
      %s218 = sphi 0, %s204
      %s222 = sphi 0, %s222
      %s224 = sphi 0, %s222
      %s225 = sphi 0, %s224
      %s239 = sphi 0, %s225
      %s247 = sphi 0, %s249
      %s250 = sphi 0, %s247
      %s251 = sphi 0, %s250
      %s267 = sphi 0, %s251
    $region4: #{tpu_custom_call.1} parent=1 // loop_header_branch
      %25 = sbr.rel (%p23) target = $region8
    $region5: #{tpu_custom_call.1} parent=1 // loop_body
      %s27 = ssub.s32 %s22, 1
      %s28 = ssub.s32 %s22, 2
      %s35 = sadd.s32 1, %s30
      %p36 = scmp.ge.s32.totalorder %s35, 1
      %s37 = scalar_select %p36, 0, %s35
      %s38 = sadd.s32 1, %s29
      %s39 = scalar_select %p36, %s38, %s29
      %p40 = scmp.ge.s32.totalorder %s39, 2
      %s41 = scalar_select %p40, 0, %s39
      %s42 = ssub.s32 %s29, %s41
      %s43 = ssub.s32 %s30, %s37
      %s44 = sor.u32 %s42, %s43
      %p45 = scmp.eq.s32.totalorder %s44, 0
      %s47 = sadd.s32 %s46, 1
      %s48 = scalar_select %p45, %s46, %s47
      %p51 = pneg %p45
      %p52 = scmp.eq.s32.totalorder %s22, 1
      %p53 = por %p51, %p52
      %p54 = scmp.ne.s32.totalorder %s46, %s49
      %p55 = scmp.eq.s32.totalorder %s22, 0
      %p56 = por %p54, %p55
      %p57 = scmp.ne.s32.totalorder %s46, %s49
      %p58 = scmp.eq.s32.totalorder %s27, 1
      %p59 = por %p57, %p58
      %p60 = scmp.ne.s32.totalorder %s49, %s50
      %p61 = scmp.eq.s32.totalorder %s27, 0
      %p62 = por %p60, %p61
      %p63 = scmp.ne.s32.totalorder %s49, %s50
      %p64 = scmp.eq.s32.totalorder %s28, 1
      %p65 = por %p63, %p64
      %p67 = scmp.ne.s32.totalorder %s50, %s66
      %p68 = scmp.eq.s32.totalorder %s28, 0
      %p69 = por %p67, %p68
      %s70 = ssub.s32 %s29, %s41
      %p71 = scmp.eq.s32.totalorder %s70, 0
      %s73 = sadd.s32 %s72, 1
      %s74 = scalar_select %p71, %s72, %s73
      %p77 = pneg %p71
      %p78 = scmp.eq.s32.totalorder %s22, 1
      %p79 = por %p77, %p78
      %p80 = scmp.ne.s32.totalorder %s72, %s75
      %p81 = scmp.eq.s32.totalorder %s22, 0
      %p82 = por %p80, %p81
      %p83 = scmp.ne.s32.totalorder %s72, %s75
      %p84 = scmp.eq.s32.totalorder %s27, 1
      %p85 = por %p83, %p84
      %p86 = scmp.ne.s32.totalorder %s75, %s76
      %p87 = scmp.eq.s32.totalorder %s27, 0
      %p88 = por %p86, %p87
      %p89 = scmp.ne.s32.totalorder %s75, %s76
      %p90 = scmp.eq.s32.totalorder %s28, 1
      %p91 = por %p89, %p90
      %p93 = scmp.ne.s32.totalorder %s76, %s92
      %p94 = scmp.eq.s32.totalorder %s28, 0
      %p95 = por %p93, %p94
      %s97 = sadd.s32 %s96, 1
      %p100 = scmp.eq.s32.totalorder %s22, 1
      %p101 = scmp.ne.s32.totalorder %s96, %s98
      %p102 = scmp.eq.s32.totalorder %s22, 0
      %p103 = por %p101, %p102
      %p104 = scmp.ne.s32.totalorder %s96, %s98
      %p105 = scmp.eq.s32.totalorder %s27, 1
      %p106 = por %p104, %p105
      %p107 = scmp.ne.s32.totalorder %s98, %s99
      %p108 = scmp.eq.s32.totalorder %s27, 0
      %p109 = por %p107, %p108
      %p110 = scmp.ne.s32.totalorder %s98, %s99
      %p111 = scmp.eq.s32.totalorder %s28, 1
      %p112 = por %p110, %p111
      %p114 = scmp.ne.s32.totalorder %s99, %s113
      %p115 = scmp.eq.s32.totalorder %s28, 0
      %p116 = por %p114, %p115
      %s118 = sadd.s32 %s117, 1
      %p121 = scmp.eq.s32.totalorder %s22, 1
      %p122 = scmp.ne.s32.totalorder %s117, %s119
      %p123 = scmp.eq.s32.totalorder %s22, 0
      %p124 = por %p122, %p123
      %p125 = scmp.ne.s32.totalorder %s117, %s119
      %p126 = scmp.eq.s32.totalorder %s27, 1
      %p127 = por %p125, %p126
      %p128 = scmp.ne.s32.totalorder %s119, %s120
      %p129 = scmp.eq.s32.totalorder %s27, 0
      %p130 = por %p128, %p129
      %p131 = scmp.ne.s32.totalorder %s119, %s120
      %p132 = scmp.eq.s32.totalorder %s28, 1
      %p133 = por %p131, %p132
      %p135 = scmp.ne.s32.totalorder %s120, %s134
      %p136 = scmp.eq.s32.totalorder %s28, 0
      %p137 = por %p135, %p136
      %s139 = sadd.s32 %s138, 1
      %p142 = scmp.eq.s32.totalorder %s22, 1
      %p143 = scmp.ne.s32.totalorder %s138, %s140
      %p144 = scmp.eq.s32.totalorder %s22, 0
      %p145 = por %p143, %p144
      %p146 = scmp.ne.s32.totalorder %s138, %s140
      %p147 = scmp.eq.s32.totalorder %s27, 1
      %p148 = por %p146, %p147
      %p149 = scmp.ne.s32.totalorder %s140, %s141
      %p150 = scmp.eq.s32.totalorder %s27, 0
      %p151 = por %p149, %p150
      %p152 = scmp.ne.s32.totalorder %s140, %s141
      %p153 = scmp.eq.s32.totalorder %s28, 1
      %p154 = por %p152, %p153
      %p156 = scmp.ne.s32.totalorder %s141, %s155
      %p157 = scmp.eq.s32.totalorder %s28, 0
      %p158 = por %p156, %p157
      %s160 = sadd.s32 %s159, 1
      %p163 = scmp.eq.s32.totalorder %s22, 1
      %p164 = scmp.ne.s32.totalorder %s159, %s161
      %p165 = scmp.eq.s32.totalorder %s22, 0
      %p166 = por %p164, %p165
      %p167 = scmp.ne.s32.totalorder %s159, %s161
      %p168 = scmp.eq.s32.totalorder %s27, 1
      %p169 = por %p167, %p168
      %p170 = scmp.ne.s32.totalorder %s161, %s162
      %p171 = scmp.eq.s32.totalorder %s27, 0
      %p172 = por %p170, %p171
      %p173 = scmp.ne.s32.totalorder %s161, %s162
      %p174 = scmp.eq.s32.totalorder %s28, 1
      %p175 = por %p173, %p174
      %p177 = scmp.ne.s32.totalorder %s162, %s176
      %p178 = scmp.eq.s32.totalorder %s28, 0
      %p179 = por %p177, %p178
      %s181 = sadd.s32 %s180, 1
      %p184 = scmp.eq.s32.totalorder %s22, 1
      %p185 = scmp.ne.s32.totalorder %s180, %s182
      %p186 = scmp.eq.s32.totalorder %s22, 0
      %p187 = por %p185, %p186
      %p188 = scmp.ne.s32.totalorder %s180, %s182
      %p189 = scmp.eq.s32.totalorder %s27, 1
      %p190 = por %p188, %p189
      %p191 = scmp.ne.s32.totalorder %s182, %s183
      %p192 = scmp.eq.s32.totalorder %s27, 0
      %p193 = por %p191, %p192
      %p194 = scmp.ne.s32.totalorder %s182, %s183
      %p195 = scmp.eq.s32.totalorder %s28, 1
      %p196 = por %p194, %p195
      %p198 = scmp.ne.s32.totalorder %s183, %s197
      %p199 = scmp.eq.s32.totalorder %s28, 0
      %p200 = por %p198, %p199
      %s202 = sadd.s32 %s201, 1
      %p205 = scmp.eq.s32.totalorder %s22, 1
      %p206 = scmp.ne.s32.totalorder %s201, %s203
      %p207 = scmp.eq.s32.totalorder %s22, 0
      %p208 = por %p206, %p207
      %p209 = scmp.ne.s32.totalorder %s201, %s203
      %p210 = scmp.eq.s32.totalorder %s27, 1
      %p211 = por %p209, %p210
      %p212 = scmp.ne.s32.totalorder %s203, %s204
      %p213 = scmp.eq.s32.totalorder %s27, 0
      %p214 = por %p212, %p213
      %p215 = scmp.ne.s32.totalorder %s203, %s204
      %p216 = scmp.eq.s32.totalorder %s28, 1
      %p217 = por %p215, %p216
      %p219 = scmp.ne.s32.totalorder %s204, %s218
      %p220 = scmp.eq.s32.totalorder %s28, 0
      %p221 = por %p219, %p220
      %s223 = sadd.s32 %s222, 1
      %p226 = scmp.eq.s32.totalorder %s22, 1
      %p227 = scmp.ne.s32.totalorder %s222, %s224
      %p228 = scmp.eq.s32.totalorder %s22, 0
      %p229 = por %p227, %p228
      %p230 = scmp.ne.s32.totalorder %s222, %s224
      %p231 = scmp.eq.s32.totalorder %s27, 1
      %p232 = por %p230, %p231
      %p233 = scmp.ne.s32.totalorder %s224, %s225
      %p234 = scmp.eq.s32.totalorder %s27, 0
      %p235 = por %p233, %p234
      %p236 = scmp.ne.s32.totalorder %s224, %s225
      %p237 = scmp.eq.s32.totalorder %s28, 1
      %p238 = por %p236, %p237
      %p240 = scmp.ne.s32.totalorder %s225, %s239
      %p241 = scmp.eq.s32.totalorder %s28, 0
      %p242 = por %p240, %p241
      %s243 = ssub.s32 %s29, %s41
      %s244 = ssub.s32 %s30, %s37
      %s245 = sor.u32 %s243, %s244
      %p246 = scmp.eq.s32.totalorder %s245, 0
      %s248 = sadd.s32 %s247, 1
      %s249 = scalar_select %p246, %s247, %s248
      %p252 = pneg %p246
      %p253 = scmp.eq.s32.totalorder %s22, 1
      %p254 = por %p252, %p253
      %p255 = scmp.ne.s32.totalorder %s247, %s250
      %p256 = scmp.eq.s32.totalorder %s22, 0
      %p257 = por %p255, %p256
      %p258 = scmp.ne.s32.totalorder %s247, %s250
      %p259 = scmp.eq.s32.totalorder %s27, 1
      %p260 = por %p258, %p259
      %p261 = scmp.ne.s32.totalorder %s250, %s251
      %p262 = scmp.eq.s32.totalorder %s27, 0
      %p263 = por %p261, %p262
      %p264 = scmp.ne.s32.totalorder %s250, %s251
      %p265 = scmp.eq.s32.totalorder %s28, 1
      %p266 = por %p264, %p265
      %p268 = scmp.ne.s32.totalorder %s251, %s267
      %p269 = scmp.eq.s32.totalorder %s28, 0
      %p270 = por %p268, %p269
      %p271 = scmp.le.s32.totalorder 1, %s22
      %p272 = scmp.lt.s32.totalorder %s22, 3
      %p273 = pnand %p271, %p272
      %p274 = pneg %p273
      // Predicated region
      $region9: #{tpu_custom_call.1} parent=5 // pred_check
        _
      $region10: #{tpu_custom_call.1} parent=5 // pred_check_branch
        %276 = sbr.rel (%p273) target = $region12
      $region11: #{tpu_custom_call.1} parent=5 // pred_region
        %s277 = ssub.s32 %s22, 1
        // Predicated region
        $region13: #{tpu_custom_call.1} parent=11 // pred_check
          %p278 = pneg %p109
        $region14: #{tpu_custom_call.1} parent=11 // pred_check_branch
          %280 = sbr.rel (%p278) target = $region16
        $region15: #{tpu_custom_call.1} parent=11 // pred_region
          _
        $region16: #{tpu_custom_call.1} parent=11 // pred_fallthru
          _
        // Predicated region
        $region17: #{tpu_custom_call.1} parent=11 // pred_check
          %p281 = pneg %p130
        $region18: #{tpu_custom_call.1} parent=11 // pred_check_branch
          %283 = sbr.rel (%p281) target = $region20
        $region19: #{tpu_custom_call.1} parent=11 // pred_region
          _
        $region20: #{tpu_custom_call.1} parent=11 // pred_fallthru
          _
        // Predicated region
        $region21: #{tpu_custom_call.1} parent=11 // pred_check
          %p284 = pneg %p151
        $region22: #{tpu_custom_call.1} parent=11 // pred_check_branch
          %286 = sbr.rel (%p284) target = $region24
        $region23: #{tpu_custom_call.1} parent=11 // pred_region
          _
        $region24: #{tpu_custom_call.1} parent=11 // pred_fallthru
          _
        // Predicated region
        $region25: #{tpu_custom_call.1} parent=11 // pred_check
          %p287 = pneg %p172
        $region26: #{tpu_custom_call.1} parent=11 // pred_check_branch
          %289 = sbr.rel (%p287) target = $region28
        $region27: #{tpu_custom_call.1} parent=11 // pred_region
          %s291 = ssub.s32 256, 256
          %292 = vsyncadd [#allocation6], %s291
          %s293 = sshll.u32 [#allocation5], 4
          %s294 = int_to_ptr.vmem [resolvable:$true] %s293
          %299 = dma.hbm_to_vmem [thread:$0]  %s5, 256, %s294, [#allocation6], 64, 64, 4
        $region28: #{tpu_custom_call.1} parent=11 // pred_fallthru
          _
        // Predicated region
        $region29: #{tpu_custom_call.1} parent=11 // pred_check
          %p300 = pneg %p193
        $region30: #{tpu_custom_call.1} parent=11 // pred_check_branch
          %302 = sbr.rel (%p300) target = $region32
        $region31: #{tpu_custom_call.1} parent=11 // pred_region
          _
        $region32: #{tpu_custom_call.1} parent=11 // pred_fallthru
          _
        // Predicated region
        $region33: #{tpu_custom_call.1} parent=11 // pred_check
          %p303 = pneg %p214
        $region34: #{tpu_custom_call.1} parent=11 // pred_check_branch
          %305 = sbr.rel (%p303) target = $region36
        $region35: #{tpu_custom_call.1} parent=11 // pred_region
          _
        $region36: #{tpu_custom_call.1} parent=11 // pred_fallthru
          _
        // Predicated region
        $region37: #{tpu_custom_call.1} parent=11 // pred_check
          %p306 = pneg %p235
        $region38: #{tpu_custom_call.1} parent=11 // pred_check_branch
          %308 = sbr.rel (%p306) target = $region40
        $region39: #{tpu_custom_call.1} parent=11 // pred_region
          _
        $region40: #{tpu_custom_call.1} parent=11 // pred_fallthru
          _
      $region12: #{tpu_custom_call.1} parent=5 // pred_fallthru
        _
      %p309 = scmp.lt.s32.totalorder %s22, 2
      // Predicated region
      $region41: #{tpu_custom_call.1} parent=5 // pred_check
        %p310 = pneg %p309
      $region42: #{tpu_custom_call.1} parent=5 // pred_check_branch
        %312 = sbr.rel (%p310) target = $region44
      $region43: #{tpu_custom_call.1} parent=5 // pred_region
        // Predicated region
        $region45: #{tpu_custom_call.1} parent=43 // pred_check
          %p313 = pneg %p56
        $region46: #{tpu_custom_call.1} parent=43 // pred_check_branch
          %315 = sbr.rel (%p313) target = $region48
        $region47: #{tpu_custom_call.1} parent=43 // pred_region
          %s316 = sand.u32 %s46, 1
          %s317 = scalar_lea.sflag [#allocation3], %s316
          %s318 = sand.u32 %s46, 1
          %s319 = smul.addr %s318, 4
          %s320 = scalar_lea.vmem [#allocation2], %s319
          %s322 = ssub.s32 64, 64
          %323 = vsyncadd %s317, %s322
          %s324 = sadd.s32 %s30, %s29
          %s325 = smul.addr %s324, 64
          %s326 = scalar_lea.hbm %s0, %s325
          %s328 = sshll.u32 %s320, 4
          %s329 = int_to_ptr.vmem [resolvable:$true] %s328
          %331 = dma.hbm_to_vmem [thread:$0]  %s326, 64, %s329, %s317
        $region48: #{tpu_custom_call.1} parent=43 // pred_fallthru
          _
        // Predicated region
        $region49: #{tpu_custom_call.1} parent=43 // pred_check
          %p332 = pneg %p82
        $region50: #{tpu_custom_call.1} parent=43 // pred_check_branch
          %334 = sbr.rel (%p332) target = $region52
        $region51: #{tpu_custom_call.1} parent=43 // pred_region
          %p335 = scmp.lt.s32.totalorder %s29, 1
          %s336 = scalar_select %p335, %s29, 1
          %s337 = scalar_lea.vmem %s1, %s336
        $region52: #{tpu_custom_call.1} parent=43 // pred_fallthru
          _
      $region44: #{tpu_custom_call.1} parent=5 // pred_fallthru
        _
      %p338 = scmp.le.s32.totalorder 1, %s22
      %p339 = scmp.lt.s32.totalorder %s22, 3
      %p340 = pnand %p338, %p339
      %p341 = pneg %p340
      // Predicated region
      $region53: #{tpu_custom_call.1} parent=5 // pred_check
        _
      $region54: #{tpu_custom_call.1} parent=5 // pred_check_branch
        %343 = sbr.rel (%p340) target = $region56
      $region55: #{tpu_custom_call.1} parent=5 // pred_region
        %s344 = ssub.s32 %s22, 1
        %s345 = sand.u32 %s49, 1
        %s346 = scalar_lea.sflag [#allocation3], %s345
        %s347 = sand.u32 %s49, 1
        %s348 = smul.addr %s347, 4
        %s349 = scalar_lea.vmem [#allocation2], %s348
        // Predicated region
        $region57: #{tpu_custom_call.1} parent=55 // pred_check
          %p350 = pneg %p62
        $region58: #{tpu_custom_call.1} parent=55 // pred_check_branch
          %352 = sbr.rel (%p350) target = $region60
        $region59: #{tpu_custom_call.1} parent=55 // pred_region
          %353 = dma.done %s346, 64
        $region60: #{tpu_custom_call.1} parent=55 // pred_fallthru
          _
        // Predicated region
        $region61: #{tpu_custom_call.1} parent=55 // pred_check
          %p354 = pneg %p172
        $region62: #{tpu_custom_call.1} parent=55 // pred_check_branch
          %356 = sbr.rel (%p354) target = $region64
        $region63: #{tpu_custom_call.1} parent=55 // pred_region
          %357 = dma.done [#allocation6], 256
        $region64: #{tpu_custom_call.1} parent=55 // pred_fallthru
          _
        %s358 = sand.u32 %s49, 1
        %s359 = scalar_lea.sflag [#allocation3], %s358
        %s360 = sand.u32 %s49, 1
        %s361 = smul.addr %s360, 4
        %s362 = scalar_lea.vmem [#allocation2], %s361
        %p363 = pneg %p62
        %p364 = pneg %p59
        %p365 = scmp.lt.s32.totalorder %s31, 1
        %s366 = scalar_select %p365, %s31, 1
        %s367 = scalar_lea.vmem %s1, %s366
        %p368 = pneg %p88
        %p369 = pneg %p85
        %p370 = pneg %p109
        %p371 = pneg %p106
        %p372 = pneg %p130
        %p373 = pneg %p127
        %p374 = pneg %p151
        %p375 = pneg %p148
        %p376 = pneg %p172
        %p377 = pneg %p169
        %p378 = pneg %p193
        %p379 = pneg %p190
        %p380 = pneg %p214
        %p381 = pneg %p211
        %p382 = pneg %p235
        %p383 = pneg %p232
        %p384 = pneg %p263
        %p385 = pneg %p260
        %s386 = sand.u32 %s250, 1
        %s387 = scalar_lea.sflag [#allocation4], %s386
        %s388 = sand.u32 %s250, 1
        %s389 = smul.addr %s388, 8
        %s390 = scalar_lea.vmem [#allocation7], %s389
        %p391 = scmp.lt.s32.totalorder %s31, 1
        %s392 = scalar_select %p391, %s31, 1
        %s393 = scalar_lea.vmem %s1, %s392
        %v395 = vld [vmem:[%s393] sm:$0x1]
        %v396 = vld [vmem:[%s3] sm:$0xf]
        %v397 = vld [vmem:[%s3 + $0x4] sm:$0xf]
        %v398 = vld [vmem:[%s3 + $0x8] sm:$0xf]
        %v399 = vld [vmem:[%s3 + $0xc] sm:$0xf]
        %v400 = vld [vmem:[%s4] sm:$0x1]
        %v405 = vunpack.c.l.b16 %v396
        %v406 = vunpack.c.l.b16 %v397
        %v407 = vunpack.c.l.b16 %v398
        %v408 = vunpack.c.l.b16 %v399
        %v409 = vpack.c.b16 %v406, %v405
        %v410 = vpack.c.b16 %v408, %v407
        %vm413 = vcmask 261120
        %v415 = vsel %vm413, %v395, 0
        %417 = vmatprep.subr.bf16.mxu0 0
        %418 = vmatpush1.bf16.msra.mxu0 %v409
        %419 = vmatprep.subr.bf16.mxu0 0
        %420 = vmatpush1.bf16.msra.mxu0 %v410
        %421 = vmatprep.subr.bf16.mxu0 0
        %422 = vmatpush1.bf16.msra.mxu0 0
        %423 = vmatprep.subr.bf16.mxu0 0
        %424 = vmatpush1.bf16.msra.mxu0 0
        %425 = vmatprep.subr.bf16.mxu0 0
        %426 = vmatpush1.bf16.msra.mxu0 0
        %427 = vmatprep.subr.bf16.mxu0 0
        %428 = vmatpush1.bf16.msra.mxu0 0
        %429 = vmatprep.subr.bf16.mxu0 0
        %430 = vmatpush1.bf16.msra.mxu0 0
        %431 = vmatprep.subr.bf16.mxu0 0
        %432 = vmatpush1.bf16.msra.mxu0 0
        %433 = vmatprep.subr.bf16.mxu0 0
        %434 = vmatpush1.bf16.msra.mxu0 0
        %435 = vmatprep.subr.bf16.mxu0 0
        %436 = vmatpush1.bf16.msra.mxu0 0
        %437 = vmatprep.subr.bf16.mxu0 0
        %438 = vmatpush1.bf16.msra.mxu0 0
        %439 = vmatprep.subr.bf16.mxu0 0
        %440 = vmatpush1.bf16.msra.mxu0 0
        %441 = vmatprep.subr.bf16.mxu0 0
        %442 = vmatpush1.bf16.msra.mxu0 0
        %443 = vmatprep.subr.bf16.mxu0 0
        %444 = vmatpush1.bf16.msra.mxu0 0
        %445 = vmatprep.subr.bf16.mxu0 0
        %446 = vmatpush1.bf16.msra.mxu0 0
        %447 = vmatprep.subr.bf16.mxu0 0
        %448 = vmatpush1.bf16.msra.mxu0 0
        %449 = vmatprep.mubr.bf16.mxu0 0
        %450 = vmatmul.mubr.bf16.gmra.mrb[0].mxu0 %v415
        %v451 = vpop.f32.mrb[0].mxu0
        %v452 = vadd.f32 %v400, %v451
        %v453 = vpop.f32.mrb[0].mxu0
        %v454 = vpop.f32.mrb[0].mxu0
        %v455 = vpop.f32.mrb[0].mxu0
        %456 = vdwg.mxu0
        %v457 = vld [vmem:[%s349] sm:$0xf]
        %v458 = vld [vmem:[%s2] sm:$0xf]
        %v459 = vld [vmem:[%s2 + $0x4] sm:$0xf]
        %v460 = vld [vmem:[%s2 + $0x8] sm:$0xf]
        %v461 = vld [vmem:[%s2 + $0xc] sm:$0xf]
        %v462 = vlaneseq
        %v463 = vshrl.u32 %v462, 7
        %v464 = vsub.s32 0, %v463
        %v465 = vrot.slane %v452, %v464
        %v470 = vunpack.c.l.b16 %v458
        %v471 = vunpack.c.l.b16 %v459
        %v472 = vunpack.c.l.b16 %v460
        %v473 = vunpack.c.l.b16 %v461
        %v474 = vpack.c.b16 %v471, %v470
        %v475 = vpack.c.b16 %v473, %v472
        %v479 = vsel %vm413, %v457, 0
        %481 = vmatprep.subr.bf16.mxu0 0
        %482 = vmatpush1.bf16.msra.mxu0 %v474
        %483 = vmatprep.subr.bf16.mxu0 0
        %484 = vmatpush1.bf16.msra.mxu0 %v475
        %485 = vmatprep.subr.bf16.mxu0 0
        %486 = vmatpush1.bf16.msra.mxu0 0
        %487 = vmatprep.subr.bf16.mxu0 0
        %488 = vmatpush1.bf16.msra.mxu0 0
        %489 = vmatprep.subr.bf16.mxu0 0
        %490 = vmatpush1.bf16.msra.mxu0 0
        %491 = vmatprep.subr.bf16.mxu0 0
        %492 = vmatpush1.bf16.msra.mxu0 0
        %493 = vmatprep.subr.bf16.mxu0 0
        %494 = vmatpush1.bf16.msra.mxu0 0
        %495 = vmatprep.subr.bf16.mxu0 0
        %496 = vmatpush1.bf16.msra.mxu0 0
        %497 = vmatprep.subr.bf16.mxu0 0
        %498 = vmatpush1.bf16.msra.mxu0 0
        %499 = vmatprep.subr.bf16.mxu0 0
        %500 = vmatpush1.bf16.msra.mxu0 0
        %501 = vmatprep.subr.bf16.mxu0 0
        %502 = vmatpush1.bf16.msra.mxu0 0
        %503 = vmatprep.subr.bf16.mxu0 0
        %504 = vmatpush1.bf16.msra.mxu0 0
        %505 = vmatprep.subr.bf16.mxu0 0
        %506 = vmatpush1.bf16.msra.mxu0 0
        %507 = vmatprep.subr.bf16.mxu0 0
        %508 = vmatpush1.bf16.msra.mxu0 0
        %509 = vmatprep.subr.bf16.mxu0 0
        %510 = vmatpush1.bf16.msra.mxu0 0
        %511 = vmatprep.subr.bf16.mxu0 0
        %512 = vmatpush1.bf16.msra.mxu0 0
        %513 = vmatprep.mubr.bf16.mxu0 0
        %514 = vmatmul.mubr.bf16.gmra.mrb[0].mxu0 %v479
        %v515 = vpop.f32.mrb[0].mxu0
        %v516 = vadd.f32 %v465, %v515
        %v517 = vpop.f32.mrb[0].mxu0
        %v518 = vpop.f32.mrb[0].mxu0
        %v519 = vpop.f32.mrb[0].mxu0
        %520 = vdwg.mxu0
        %v521 = vmax.f32 %v516, 0.0
        %v522 = vpack.c.bf16 %v521, %v521
        %v523 = vld [vmem:[#allocation5] sm:$0xf]
        %v524 = vld [vmem:[#allocation5 + $0x4] sm:$0xf]
        %v525 = vld [vmem:[#allocation5 + $0x8] sm:$0xf]
        %v526 = vld [vmem:[#allocation5 + $0xc] sm:$0xf]
        %v527 = vld [vmem:[%s6] sm:$0x1]
        %v529 = vlaneseq
        %v530 = vshrl.u32 %v529, 7
        %v531 = vsub.s32 0, %v530
        %v532 = vrot.slane %v527, %v531
        %v538 = vunpack.c.l.b16 %v523
        %v539 = vunpack.c.l.b16 %v524
        %v540 = vunpack.c.l.b16 %v525
        %v541 = vunpack.c.l.b16 %v526
        %v542 = vpack.c.b16 %v539, %v538
        %v543 = vpack.c.b16 %v541, %v540
        %v547 = vsel %vm413, %v522, 0
        %549 = vmatprep.subr.bf16.mxu0 0
        %550 = vmatpush1.bf16.msra.mxu0 %v542
        %551 = vmatprep.subr.bf16.mxu0 0
        %552 = vmatpush1.bf16.msra.mxu0 %v543
        %553 = vmatprep.subr.bf16.mxu0 0
        %554 = vmatpush1.bf16.msra.mxu0 0
        %555 = vmatprep.subr.bf16.mxu0 0
        %556 = vmatpush1.bf16.msra.mxu0 0
        %557 = vmatprep.subr.bf16.mxu0 0
        %558 = vmatpush1.bf16.msra.mxu0 0
        %559 = vmatprep.subr.bf16.mxu0 0
        %560 = vmatpush1.bf16.msra.mxu0 0
        %561 = vmatprep.subr.bf16.mxu0 0
        %562 = vmatpush1.bf16.msra.mxu0 0
        %563 = vmatprep.subr.bf16.mxu0 0
        %564 = vmatpush1.bf16.msra.mxu0 0
        %565 = vmatprep.subr.bf16.mxu0 0
        %566 = vmatpush1.bf16.msra.mxu0 0
        %567 = vmatprep.subr.bf16.mxu0 0
        %568 = vmatpush1.bf16.msra.mxu0 0
        %569 = vmatprep.subr.bf16.mxu0 0
        %570 = vmatpush1.bf16.msra.mxu0 0
        %571 = vmatprep.subr.bf16.mxu0 0
        %572 = vmatpush1.bf16.msra.mxu0 0
        %573 = vmatprep.subr.bf16.mxu0 0
        %574 = vmatpush1.bf16.msra.mxu0 0
        %575 = vmatprep.subr.bf16.mxu0 0
        %576 = vmatpush1.bf16.msra.mxu0 0
        %577 = vmatprep.subr.bf16.mxu0 0
        %578 = vmatpush1.bf16.msra.mxu0 0
        %579 = vmatprep.subr.bf16.mxu0 0
        %580 = vmatpush1.bf16.msra.mxu0 0
        %581 = vmatprep.mubr.bf16.mxu0 0
        %582 = vmatmul.mubr.bf16.gmra.mrb[0].mxu0 %v547
        %v583 = vpop.f32.mrb[0].mxu0
        %v584 = vadd.f32 %v532, %v583
        %v585 = vpop.f32.mrb[0].mxu0
        %v586 = vpop.f32.mrb[0].mxu0
        %v587 = vpop.f32.mrb[0].mxu0
        %588 = vdwg.mxu0
        %v589 = vmax.f32 %v584, 0.0
        %v590 = vpack.c.bf16 %v589, %v589
        %v591 = vld [vmem:[%s7] sm:$0xf]
        %v592 = vld [vmem:[%s7 + $0x4] sm:$0xf]
        %v593 = vld [vmem:[%s7 + $0x8] sm:$0xf]
        %v594 = vld [vmem:[%s7 + $0xc] sm:$0xf]
        %v595 = vld [vmem:[%s8] sm:$0x1]
        %v597 = vlaneseq
        %v598 = vshrl.u32 %v597, 7
        %v599 = vsub.s32 0, %v598
        %v600 = vrot.slane %v595, %v599
        %v606 = vunpack.c.l.b16 %v591
        %v607 = vunpack.c.l.b16 %v592
        %v608 = vunpack.c.l.b16 %v593
        %v609 = vunpack.c.l.b16 %v594
        %v610 = vpack.c.b16 %v607, %v606
        %v611 = vpack.c.b16 %v609, %v608
        %v615 = vsel %vm413, %v590, 0
        %617 = vmatprep.subr.bf16.mxu0 0
        %618 = vmatpush1.bf16.msra.mxu0 %v610
        %619 = vmatprep.subr.bf16.mxu0 0
        %620 = vmatpush1.bf16.msra.mxu0 %v611
        %621 = vmatprep.subr.bf16.mxu0 0
        %622 = vmatpush1.bf16.msra.mxu0 0
        %623 = vmatprep.subr.bf16.mxu0 0
        %624 = vmatpush1.bf16.msra.mxu0 0
        %625 = vmatprep.subr.bf16.mxu0 0
        %626 = vmatpush1.bf16.msra.mxu0 0
        %627 = vmatprep.subr.bf16.mxu0 0
        %628 = vmatpush1.bf16.msra.mxu0 0
        %629 = vmatprep.subr.bf16.mxu0 0
        %630 = vmatpush1.bf16.msra.mxu0 0
        %631 = vmatprep.subr.bf16.mxu0 0
        %632 = vmatpush1.bf16.msra.mxu0 0
        %633 = vmatprep.subr.bf16.mxu0 0
        %634 = vmatpush1.bf16.msra.mxu0 0
        %635 = vmatprep.subr.bf16.mxu0 0
        %636 = vmatpush1.bf16.msra.mxu0 0
        %637 = vmatprep.subr.bf16.mxu0 0
        %638 = vmatpush1.bf16.msra.mxu0 0
        %639 = vmatprep.subr.bf16.mxu0 0
        %640 = vmatpush1.bf16.msra.mxu0 0
        %641 = vmatprep.subr.bf16.mxu0 0
        %642 = vmatpush1.bf16.msra.mxu0 0
        %643 = vmatprep.subr.bf16.mxu0 0
        %644 = vmatpush1.bf16.msra.mxu0 0
        %645 = vmatprep.subr.bf16.mxu0 0
        %646 = vmatpush1.bf16.msra.mxu0 0
        %647 = vmatprep.subr.bf16.mxu0 0
        %648 = vmatpush1.bf16.msra.mxu0 0
        %649 = vmatprep.mubr.bf16.mxu0 0
        %650 = vmatmul.mubr.bf16.gmra.mrb[0].mxu0 %v615
        %v651 = vpop.f32.mrb[0].mxu0
        %v652 = vadd.f32 %v600, %v651
        %v653 = vpop.f32.mrb[0].mxu0
        %v654 = vpop.f32.mrb[0].mxu0
        %v655 = vpop.f32.mrb[0].mxu0
        %656 = vdwg.mxu0
        %vm657 = vcmask 64512
        %658 = vst.msk [vmem:[%s390] sm:$0xff] %vm657, %v652
        %s659 = sand.u32 %s250, 1
        %s660 = scalar_lea.sflag [#allocation4], %s659
        %s661 = sand.u32 %s250, 1
        %s662 = smul.addr %s661, 8
        %s663 = scalar_lea.vmem [#allocation7], %s662
        // Predicated region
        $region65: #{tpu_custom_call.1} parent=55 // pred_check
          %p664 = pneg %p260
        $region66: #{tpu_custom_call.1} parent=55 // pred_check_branch
          %666 = sbr.rel (%p664) target = $region68
        $region67: #{tpu_custom_call.1} parent=55 // pred_region
          %s668 = ssub.s32 128, 128
          %669 = vsyncadd %s660, %s668
          %s670 = sadd.s32 %s32, %s31
          %s671 = smul.addr %s670, 128
          %s672 = scalar_lea.hbm %s9, %s671
          %s674 = sshll.u32 %s663, 4
          %s675 = int_to_ptr.vmem [resolvable:$true] %s674
          %677 = dma.vmem_to_hbm [thread:$0]  %s675, 128, %s672, %s660
        $region68: #{tpu_custom_call.1} parent=55 // pred_fallthru
          _
      $region56: #{tpu_custom_call.1} parent=5 // pred_fallthru
        _
      %p678 = scmp.le.s32.totalorder 2, %s22
      // Predicated region
      $region69: #{tpu_custom_call.1} parent=5 // pred_check
        %p679 = pneg %p678
      $region70: #{tpu_custom_call.1} parent=5 // pred_check_branch
        %681 = sbr.rel (%p679) target = $region72
      $region71: #{tpu_custom_call.1} parent=5 // pred_region
        %s682 = ssub.s32 %s22, 2
        // Predicated region
        $region73: #{tpu_custom_call.1} parent=71 // pred_check
          %p683 = pneg %p266
        $region74: #{tpu_custom_call.1} parent=71 // pred_check_branch
          %685 = sbr.rel (%p683) target = $region76
        $region75: #{tpu_custom_call.1} parent=71 // pred_region
          %s686 = sand.u32 %s251, 1
          %s687 = scalar_lea.sflag [#allocation4], %s686
          %s688 = sand.u32 %s251, 1
          %s689 = smul.addr %s688, 8
          %s690 = scalar_lea.vmem [#allocation7], %s689
          %691 = dma.done %s687, 128
        $region76: #{tpu_custom_call.1} parent=71 // pred_fallthru
          _
      $region72: #{tpu_custom_call.1} parent=5 // pred_fallthru
        _
    $region6: #{tpu_custom_call.1} parent=1 // loop_footer
      %s26 = sadd.s32 1, %s22
    $region7: #{tpu_custom_call.1} parent=1 // loop_footer_branch
      %21 = sbr.rel target = $region3
    $region8: #{tpu_custom_call.1} parent=1 // loop_exit
      _
    %692 = vsyncpa [#allocation3], 1
    %s693 = scalar_lea.sflag [#allocation3], 1
    %694 = vsyncpa %s693, 1
    %695 = vsyncpa [#allocation6], 1
    %696 = vsyncpa [#allocation4], 1
    %s697 = scalar_lea.sflag [#allocation4], 1
    %698 = vsyncpa %s697, 1

</llo_original>
